<compile_context>
chip_gen: v7x
topology: tpu7x:2x2x1
jax: 0.10.0
libtpu: 0.0.40
codegen_flags: <defaults>
</compile_context>

<pallas_src>
import math

import jax
import jax.numpy as jnp
from jax.experimental import pallas as pl
from jax.experimental.pallas import tpu as pltpu


def _identity_copy_kernel(x_ref, o_ref):
    # Pure lane-dense identity copy of the current (block_rows, width) tile.
    o_ref[...] = x_ref[...]


def _vmem_limit_bytes():
    # ~75% of physical VMEM: 48 MiB on v7x (64 MiB), 96 MiB on v5e/v6e (128 MiB).
    try:
        cap = int(pltpu.get_tpu_info().vmem_capacity_bytes)
        return max(16 << 20, (cap * 3) // 4)
    except Exception:
        return 48 << 20  # v7x-safe fallback


def _choose_copy_slab(n, l, itemsize):
    """Pick a lane-dense (rows, width) slab covering the n*l contiguous elems."""
    total = n * l
    sub = max(8, 32 // itemsize)  # min sublane rows for this dtype's packing
    fallback = None
    for w in (32768, 16384, 8192, 4096, 2048, 1024, 512, 256, 128):
        if total % w == 0:
            rows = total // w
            if rows % sub == 0:
                return rows, w, sub       # fully unmasked stores
            if fallback is None:
                fallback = (rows, w)      # lane-dense, rows = full extent
    if fallback is not None:
        return fallback[0], fallback[1], sub
    # total not a multiple of 128: copy the (n, l) view directly
    # (full-extent last dim keeps the block legal; tail stores are masked).
    return n, l, sub


def _flatten_pallas_copy(x, n, l, tile_budget_bytes):
    itemsize = jnp.dtype(x.dtype).itemsize
    vmem_limit = _vmem_limit_bytes()
    if tile_budget_bytes is None:
        # ~8 MiB/tile on v7x, ~16 MiB on v5e/v6e (in+out double-buffered fits).
        tile_budget_bytes = max(1 << 20, min(16 << 20, vmem_limit // 6))

    rows, w, sub = _choose_copy_slab(n, l, itemsize)
    slab = jnp.reshape(x, (rows, w))  # metadata-only view of the flat buffer

    # Largest multiple of `sub` rows whose tile fits the per-tile budget;
    # ragged tail is handled by the cdiv grid (masked last block).
    rows_fit = max(sub, (tile_budget_bytes // max(1, w * itemsize)) // sub * sub)
    block_rows = rows if rows < sub else min(rows, rows_fit)
    # Give the "parallel" axis >=2 steps when there is enough work so both
    # v7x TensorCores can issue DMAs concurrently.
    if block_rows >= rows and rows >= 2 * sub:
        block_rows = max(sub, ((rows // 2) // sub) * sub)

    grid = (pl.cdiv(rows, block_rows),)

    out_slab = pl.pallas_call(
        _identity_copy_kernel,
        out_shape=jax.ShapeDtypeStruct((rows, w), slab.dtype),
        grid_spec=pltpu.PrefetchScalarGridSpec(
            num_scalar_prefetch=0,
            grid=grid,
            in_specs=[pl.BlockSpec((block_rows, w), lambda i: (i, 0))],
            out_specs=pl.BlockSpec((block_rows, w), lambda i: (i, 0)),
        ),
        compiler_params=pltpu.CompilerParams(
            dimension_semantics=("parallel",),
            vmem_limit_bytes=vmem_limit,
        ),
        cost_estimate=pl.CostEstimate(
            flops=0,
            transcendentals=0,
            bytes_accessed=2 * rows * w * itemsize,
        ),
        # Reuse the input HBM slab for the output (identity copy ⇒ safe even
        # for the masked/unwritten padding rows of a ragged last block).
        input_output_aliases=({0: 0} if slab is not x else {}),
    )(slab)

    return jnp.reshape(out_slab, (n, l))  # metadata-only view back to (N, L)


def flatten(x, *, force_pallas_copy=False, tile_budget_bytes=None):
    """Equivalent of torch's x.view(x.size(0), -1) for a contiguous input.

    Default path is a metadata-only reshape (no data movement). Set
    force_pallas_copy=True to route through the Pallas identity-copy kernel.
    """
    n = x.shape[0]
    l = int(math.prod(x.shape[1:]))

    if not force_pallas_copy or n * l == 0:
        return jnp.reshape(x, (n, l))
    return _flatten_pallas_copy(x, n, l, tile_budget_bytes)


if __name__ == "__main__":
    key = jax.random.PRNGKey(0)
    # Small NCHW input consistent with the ProtoNet conv stack.
    x = jax.random.normal(key, (2, 4, 16, 16), dtype=jnp.float32)

    ref = jnp.reshape(x, (x.shape[0], -1))

    # Default (recommended) path: metadata-only flatten.
    out_fast = jax.block_until_ready(flatten(x))

    # Forced Pallas path: exercises the identity-copy kernel once.
    out_kernel = jax.block_until_ready(flatten(x, force_pallas_copy=True))

    assert out_fast.shape == ref.shape, (out_fast.shape, ref.shape)
    assert out_kernel.shape == ref.shape, (out_kernel.shape, ref.shape)
    assert jnp.array_equal(out_fast, ref), "flatten (reshape path) mismatch"
    assert jnp.array_equal(out_kernel, ref), "flatten (pallas path) mismatch"

    print("KERNEL_OK")
</pallas_src>

<mosaic_0001>
module attributes {stable_mosaic.version = 11 : i64} {
  func.func @_identity_copy_kernel(%arg0: i32, %arg1: memref<8x256xf32, #tpu.memory_space<vmem>>, %arg2: memref<8x256xf32, #tpu.memory_space<vmem>>) attributes {dimension_semantics = [#tpu.dimension_semantics<parallel>], iteration_bounds = array<i64: 1>, scalar_prefetch = 0 : i64, scratch_operands = 0 : i64, tpu.core_type = #tpu.core_type<tc>, window_params = [{transform_indices = @transform_0, window_bounds = array<i64: 8, 256>}, {transform_indices = @transform_1, window_bounds = array<i64: 8, 256>}]} {
    %c0 = arith.constant 0 : index
    %c0_0 = arith.constant 0 : index
    %0 = vector.load %arg1[%c0, %c0_0] : memref<8x256xf32, #tpu.memory_space<vmem>>, vector<8x256xf32>
    %c0_1 = arith.constant 0 : index
    %c0_2 = arith.constant 0 : index
    %1 = vector.load %arg2[%c0_1, %c0_2] : memref<8x256xf32, #tpu.memory_space<vmem>>, vector<8x256xf32>
    tpu.vector_store %arg2[%c0_1, %c0_2], %0 {strides = array<i32>} : memref<8x256xf32, #tpu.memory_space<vmem>>, vector<8x256xf32>,
    return
  }
  func.func @transform_0(%arg0: i32) -> (i32, i32) {
    %c0_i32 = arith.constant 0 : i32
    %c0_i32_0 = arith.constant 0 : i32
    return %arg0, %c0_i32 : i32, i32
  }
  func.func @transform_1(%arg0: i32) -> (i32, i32) {
    %c0_i32 = arith.constant 0 : i32
    %c0_i32_0 = arith.constant 0 : i32
    return %arg0, %c0_i32 : i32, i32
  }
}

</mosaic_0001>

<llo_original>
// kernel: tpu_custom_call.1
$region0: #{tpu_custom_call.1}
  #allocation0 [shape = 'u32[]', space=smem, size = 0x4, offset = 0x4, fixed_abs, tag = 'smem constant byte address 0x4 - core index']
  #allocation1 [shape = 'u32[144,128]{1,0:T(1,128)}', space=vmem, size = 0x12000, scoped, tag = 'internal scratch']
  %s0 = inlined_call_operand.hbm [shape: f32[8,256], index: 0, kind: input, shape index: {}, may-alias: {0,1}]
  %s1 = inlined_call_operand.hbm [shape: f32[8,256], index: 1, kind: output, shape index: {}, may-alias: {0,1}]
  %s2 = sld [smem:[#allocation0]]
  $region18: #{tpu_custom_call.1} parent=0
    _
  %s4 = ssub.s32 1, %s2
  %s5 = scalar_select 0, %s4, %s2
  $region1: #{tpu_custom_call.1} parent=0
    #allocation2 [shape = 'u8[8192]{0}', space=vmem, size = 0x2000, scoped, tag = 'input window, operand 0, single buffered']
    #allocation3 [shape = 's32[1]{0}', space=sflag, size = 0x4, scoped, tag = 'scoped memory for tpu_custom_call.1']
    #allocation4 [shape = 's32[1]{0}', space=sflag, size = 0x4, scoped, tag = 'scoped memory for tpu_custom_call.1']
    #allocation5 [shape = 'u8[8192]{0}', space=vmem, size = 0x2000, scoped, tag = 'output window, operand 0, single buffered']
    %6 = vsyncpa [#allocation3], 0
    %7 = vsyncpa [#allocation4], 0
    // Predicated region
    $region2: #{tpu_custom_call.1} parent=1 // pred_check
      _
    $region3: #{tpu_custom_call.1} parent=1 // pred_check_branch
      %9 = sbr.rel (0) target = $region5
    $region4: #{tpu_custom_call.1} parent=1 // pred_region
      %s11 = ssub.s32 256, 256
      %12 = vsyncadd [#allocation3], %s11
      %s14 = sshll.u32 [#allocation2], 4
      %s15 = int_to_ptr.vmem [resolvable:$true] %s14
      %17 = dma.hbm_to_vmem [thread:$0]  %s0, 256, %s15, [#allocation3]
    $region5: #{tpu_custom_call.1} parent=1 // pred_fallthru
      _
    // Predicated region
    $region6: #{tpu_custom_call.1} parent=1 // pred_check
      _
    $region7: #{tpu_custom_call.1} parent=1 // pred_check_branch
      %19 = sbr.rel (0) target = $region9
    $region8: #{tpu_custom_call.1} parent=1 // pred_region
      %20 = dma.done [#allocation3], 256
    $region9: #{tpu_custom_call.1} parent=1 // pred_fallthru
      _
    %v21 = vld [vmem:[#allocation2] sm:$0xff]
    %v22 = vld [vmem:[#allocation2 + $0x8] sm:$0xff]
    %23 = vst [vmem:[#allocation5] sm:$0xff] %v21
    %24 = vst [vmem:[#allocation5 + $0x8] sm:$0xff] %v22
    // Predicated region
    $region10: #{tpu_custom_call.1} parent=1 // pred_check
      _
    $region11: #{tpu_custom_call.1} parent=1 // pred_check_branch
      %26 = sbr.rel (0) target = $region13
    $region12: #{tpu_custom_call.1} parent=1 // pred_region
      %s28 = ssub.s32 256, 256
      %29 = vsyncadd [#allocation4], %s28
      %s31 = sshll.u32 [#allocation5], 4
      %s32 = int_to_ptr.vmem [resolvable:$true] %s31
      %34 = dma.vmem_to_hbm [thread:$0]  %s32, 256, %s1, [#allocation4]
    $region13: #{tpu_custom_call.1} parent=1 // pred_fallthru
      _
    // Predicated region
    $region14: #{tpu_custom_call.1} parent=1 // pred_check
      _
    $region15: #{tpu_custom_call.1} parent=1 // pred_check_branch
      %36 = sbr.rel (0) target = $region17
    $region16: #{tpu_custom_call.1} parent=1 // pred_region
      %37 = dma.done [#allocation4], 256
    $region17: #{tpu_custom_call.1} parent=1 // pred_fallthru
      _
    %38 = vsyncpa [#allocation3], 1
    %39 = vsyncpa [#allocation4], 1

</llo_original>
